<compile_context>
chip_gen: v5e
topology: v5e:2x2
jax: 0.10.0
libtpu: 0.0.40
codegen_flags: <defaults>
</compile_context>

<pallas_src>
import jax
import jax.numpy as jnp
from jax.experimental import pallas as pl
from jax.experimental.pallas import tpu as pltpu


# ----------------------------- tiling helpers ---------------------------------------


def _round_up(x, m):
    return ((x + m - 1) // m) * m


def _choose_dim_tile(dim, cap, align):
    """Pick (tile, padded_dim) for one array dimension.

    If the dim fits in `cap`, use the full dim as a single block (no padding, full-dim
    blocks are exempt from the (8,128) divisibility rule).  Otherwise pad to a multiple
    of `align` and pick the largest multiple of `align` <= cap that divides it.
    """
    if dim <= cap:
        return dim, dim
    padded = _round_up(dim, align)
    tile = align
    t = 2 * align
    while t <= cap:
        if padded % t == 0:
            tile = t
        t += align
    return tile, padded


_TN_CAP = 512    # vocab (lane) tile cap
_TK_CAP = 1024   # d_model (contraction) tile cap; D <= cap => single-K kernel
_TM_CAP = 1024   # rows tile cap; M <= cap => weight streamed exactly once


# ----------------------------- kernels -----------------------------------------------


def _generator_kernel_single_k(x_ref, w_ref, b_ref, o_ref):
    # x_ref: (tm, D)  activations tile; w_ref: (D, tn) pre-transposed weight tile;
    # b_ref: (1, tn)  bias tile; o_ref: (tm, tn) logits tile.
    acc = jnp.dot(
        x_ref[...].astype(w_ref.dtype),   # bf16 operands when params are bf16
        w_ref[...],
        preferred_element_type=jnp.float32,
    )
    o_ref[...] = (acc + b_ref[...].astype(jnp.float32)).astype(o_ref.dtype)


def _generator_kernel_multi_k(x_ref, w_ref, b_ref, o_ref, acc_ref):
    # 3-D grid (i, j, k) with k the reduction axis; acc_ref persists across k.
    k = pl.program_id(2)

    @pl.when(k == 0)
    def _init():
        acc_ref[...] = jnp.zeros_like(acc_ref)

    acc_ref[...] += jnp.dot(
        x_ref[...].astype(w_ref.dtype),
        w_ref[...],
        preferred_element_type=jnp.float32,
    )

    @pl.when(k == pl.num_programs(2) - 1)
    def _finalize():
        o_ref[...] = (acc_ref[...] + b_ref[...].astype(jnp.float32)).astype(o_ref.dtype)


# ----------------------------- parameter prep (one-time, "module init") --------------


def prepare_generator_params(weight, bias, *, param_dtype=None):
    """One-time relayout of nn.Linear parameters for the Pallas kernel.

    weight: (V, D) in PyTorch layout; bias: (V,).
    Returns:
      w_t : (Dp, Vp) transposed (canonical MXU RHS), padded, cast to `param_dtype`.
      b2d : (1, Vp)  bias, kept in f32 for the finalize add.
    Do this once per model, NOT per forward call.
    """
    V, D = weight.shape
    if param_dtype is None:
        param_dtype = weight.dtype
    _, Vp = _choose_dim_tile(V, _TN_CAP, 128)
    _, Dp = _choose_dim_tile(D, _TK_CAP, 128)

    w_t = weight.T.astype(param_dtype)                      # (D, V)
    if (Dp, Vp) != (D, V):
        w_t = jnp.pad(w_t, ((0, Dp - D), (0, Vp - V)))      # zeros in K => exact

    b2d = bias.reshape(1, V).astype(jnp.float32)
    if Vp != V:
        b2d = jnp.pad(b2d, ((0, 0), (0, Vp - V)))
    return w_t, b2d


# ----------------------------- forward ------------------------------------------------


def generator_forward(decoder_output, w_t, bias2d, *, vocab_size):
    """decoder_output: (B, S, D); w_t: (Dp, Vp) from prepare_generator_params;
    bias2d: (1, Vp); returns logits (B, S, vocab_size) in decoder_output's dtype."""
    out_dtype = decoder_output.dtype
    B, S, D = decoder_output.shape
    Dp, Vp = w_t.shape
    assert Dp >= D and Vp >= vocab_size
    M = B * S

    # Tile selection (deterministic, matches prepare_generator_params padding).
    tn, _ = _choose_dim_tile(Vp, _TN_CAP, 128)
    tk, _ = _choose_dim_tile(Dp, _TK_CAP, 128)

    m_align = 8 if jnp.dtype(out_dtype).itemsize >= 4 else 16   # sublane packing
    Mp = _round_up(M, m_align)
    if Mp <= _TM_CAP:
        tm = Mp                      # weight streamed from HBM exactly once
    else:
        tm = 512
        Mp = _round_up(M, tm)

    # Only the (small) activation tensor is padded per call.
    x2d = decoder_output.reshape(M, D)
    if (Mp, Dp) != (M, D):
        x2d = jnp.pad(x2d, ((0, Mp - M), (0, Dp - D)))

    grid_i, grid_j, grid_k = Mp // tm, Vp // tn, Dp // tk

    # VMEM budget: double-buffered in/out tiles + f32 accumulator, plus margin.
    x_it = x2d.dtype.itemsize
    w_it = w_t.dtype.itemsize
    o_it = jnp.dtype(out_dtype).itemsize
    per_step = 2 * (tm * tk * x_it + tk * tn * w_it + tn * 4 + tm * tn * o_it)
    per_step += tm * tn * 4
    vmem_limit = int(min(64 * 1024 * 1024, per_step + 12 * 1024 * 1024))

    cost = pl.CostEstimate(
        flops=2 * Mp * Dp * Vp,
        transcendentals=0,
        bytes_accessed=(grid_i * Dp * Vp * w_it          # weight streamed per i-tile
                        + grid_j * Mp * Dp * x_it        # activations per j-tile
                        + Vp * 4
                        + Mp * Vp * o_it),
    )

    if grid_k == 1:
        # Single-shot: no reduction grid, no accumulator scratch, output written once.
        grid_spec = pltpu.PrefetchScalarGridSpec(
            num_scalar_prefetch=0,
            grid=(grid_i, grid_j),
            in_specs=[
                pl.BlockSpec((tm, tk), lambda i, j: (i, 0)),   # activations
                pl.BlockSpec((tk, tn), lambda i, j: (0, j)),   # weight (D, V) layout
                pl.BlockSpec((1, tn), lambda i, j: (0, j)),    # bias
            ],
            out_specs=pl.BlockSpec((tm, tn), lambda i, j: (i, j)),
            scratch_shapes=[],
        )
        kernel = _generator_kernel_single_k
        dim_sem = ("parallel", "parallel")
    else:
        grid_spec = pltpu.PrefetchScalarGridSpec(
            num_scalar_prefetch=0,
            grid=(grid_i, grid_j, grid_k),
            in_specs=[
                pl.BlockSpec((tm, tk), lambda i, j, k: (i, k)),
                pl.BlockSpec((tk, tn), lambda i, j, k: (k, j)),
                pl.BlockSpec((1, tn), lambda i, j, k: (0, j)),
            ],
            out_specs=pl.BlockSpec((tm, tn), lambda i, j, k: (i, j)),
            scratch_shapes=[pltpu.VMEM((tm, tn), jnp.float32)],
        )
        kernel = _generator_kernel_multi_k
        dim_sem = ("parallel", "parallel", "arbitrary")

    out2d = pl.pallas_call(
        kernel,
        out_shape=jax.ShapeDtypeStruct((Mp, Vp), out_dtype),
        grid_spec=grid_spec,
        compiler_params=pltpu.CompilerParams(
            dimension_semantics=dim_sem,
            vmem_limit_bytes=vmem_limit,
        ),
        cost_estimate=cost,
    )(x2d, w_t, bias2d)

    if Mp != M or Vp != vocab_size:
        out2d = out2d[:M, :vocab_size]
    return out2d.reshape(B, S, vocab_size)


# ----------------------------- demo / correctness check -------------------------------


if __name__ == "__main__":
    batch, seq, d_model, vocab_size = 2, 8, 32, 64

    key = jax.random.PRNGKey(0)
    k_x, k_w, k_b = jax.random.split(key, 3)

    decoder_output = jax.random.normal(k_x, (batch, seq, d_model), dtype=jnp.float32)

    # Deterministic parameter init mimicking nn.Linear (uniform in +/- 1/sqrt(d_model)).
    bound = 1.0 / (d_model ** 0.5)
    weight = jax.random.uniform(k_w, (vocab_size, d_model), dtype=jnp.float32,
                                minval=-bound, maxval=bound)
    bias = jax.random.uniform(k_b, (vocab_size,), dtype=jnp.float32,
                              minval=-bound, maxval=bound)

    fwd = jax.jit(generator_forward, static_argnames=("vocab_size",))

    # --- Path A: f32 params / f32 activations (exact vs PyTorch semantics) ---
    w_t32, b32 = prepare_generator_params(weight, bias, param_dtype=jnp.float32)
    logits = jax.block_until_ready(fwd(decoder_output, w_t32, b32, vocab_size=vocab_size))
    ref = decoder_output @ weight.T + bias
    assert logits.shape == (batch, seq, vocab_size)
    assert jnp.allclose(logits, ref, atol=1e-4, rtol=1e-4)

    # --- Path B: bf16 params + bf16 activations (recommended production path:
    #     halves weight HBM traffic, full-rate bf16 MXU, f32 accumulation) ---
    w_t16, b16 = prepare_generator_params(weight, bias, param_dtype=jnp.bfloat16)
    x16 = decoder_output.astype(jnp.bfloat16)
    logits16 = jax.block_until_ready(fwd(x16, w_t16, b16, vocab_size=vocab_size))
    ref16 = (x16.astype(jnp.float32) @ weight.astype(jnp.bfloat16).astype(jnp.float32).T
             + bias)
    assert logits16.shape == (batch, seq, vocab_size)
    assert jnp.allclose(logits16.astype(jnp.float32), ref16, atol=5e-2, rtol=5e-2)

    # TODO(synk): v7x fp8 / v5e-v6e int8 weight quantization (per-channel scale folded
    # into the finalize) would further halve/quarter weight HBM bytes; omitted here.

    print("KERNEL_OK")
</pallas_src>

<mosaic_0001>
module attributes {stable_mosaic.version = 11 : i64} {
  func.func @_generator_kernel_single_k(%arg0: i32, %arg1: i32, %arg2: memref<16x32xf32, #tpu.memory_space<vmem>>, %arg3: memref<32x64xf32, #tpu.memory_space<vmem>>, %arg4: memref<1x64xf32, #tpu.memory_space<vmem>>, %arg5: memref<16x64xf32, #tpu.memory_space<vmem>>) attributes {dimension_semantics = [#tpu.dimension_semantics<parallel>, #tpu.dimension_semantics<parallel>], iteration_bounds = array<i64: 1, 1>, scalar_prefetch = 0 : i64, scratch_operands = 0 : i64, tpu.core_type = #tpu.core_type<tc>, window_params = [{transform_indices = @transform_0, window_bounds = array<i64: 16, 32>}, {transform_indices = @transform_1, window_bounds = array<i64: 32, 64>}, {transform_indices = @transform_2, window_bounds = array<i64: 1, 64>}, {transform_indices = @transform_3, window_bounds = array<i64: 16, 64>}]} {
    %c0 = arith.constant 0 : index
    %c0_0 = arith.constant 0 : index
    %0 = vector.load %arg2[%c0, %c0_0] : memref<16x32xf32, #tpu.memory_space<vmem>>, vector<16x32xf32>
    %c0_1 = arith.constant 0 : index
    %c0_2 = arith.constant 0 : index
    %1 = vector.load %arg3[%c0_1, %c0_2] : memref<32x64xf32, #tpu.memory_space<vmem>>, vector<32x64xf32>
    %cst = arith.constant dense<0.000000e+00> : vector<16x64xf32>
    %2 = tpu.matmul %0, %1, %cst {dimension_numbers = #tpu.dot_dimension_numbers<[1], [0], [0], [1], [0, 0, 1, 1], [], []>} : vector<16x32xf32>, vector<32x64xf32>, vector<16x64xf32> -> vector<16x64xf32>
    %c0_3 = arith.constant 0 : index
    %c0_4 = arith.constant 0 : index
    %3 = vector.load %arg4[%c0_3, %c0_4] : memref<1x64xf32, #tpu.memory_space<vmem>>, vector<1x64xf32>
    %4 = vector.broadcast %3 : vector<1x64xf32> to vector<16x64xf32>
    %5 = arith.addf %2, %4 : vector<16x64xf32>
    %c0_5 = arith.constant 0 : index
    %c0_6 = arith.constant 0 : index
    %6 = vector.load %arg5[%c0_5, %c0_6] : memref<16x64xf32, #tpu.memory_space<vmem>>, vector<16x64xf32>
    tpu.vector_store %arg5[%c0_5, %c0_6], %5 {strides = array<i32>} : memref<16x64xf32, #tpu.memory_space<vmem>>, vector<16x64xf32>,
    return
  }
  func.func @transform_0(%arg0: i32, %arg1: i32) -> (i32, i32) {
    %c0_i32 = arith.constant 0 : i32
    %c0_i32_0 = arith.constant 0 : i32
    return %arg0, %c0_i32 : i32, i32
  }
  func.func @transform_1(%arg0: i32, %arg1: i32) -> (i32, i32) {
    %c0_i32 = arith.constant 0 : i32
    %c0_i32_0 = arith.constant 0 : i32
    return %c0_i32, %arg1 : i32, i32
  }
  func.func @transform_2(%arg0: i32, %arg1: i32) -> (i32, i32) {
    %c0_i32 = arith.constant 0 : i32
    %c0_i32_0 = arith.constant 0 : i32
    return %c0_i32, %arg1 : i32, i32
  }
  func.func @transform_3(%arg0: i32, %arg1: i32) -> (i32, i32) {
    %c0_i32 = arith.constant 0 : i32
    return %arg0, %arg1 : i32, i32
  }
}

</mosaic_0001>

<llo_original>
// kernel: generator_forward.1
$region0: #{generator_forward.1}
  #allocation0 [shape = 'u32[]', space=smem, size = 0x4, offset = 0x4, fixed_abs, tag = 'smem constant byte address 0x4 - core index']
  #allocation1 [shape = 'u32[72,128]{1,0:T(1,128)}', space=vmem, size = 0x9000, scoped, tag = 'internal scratch']
  %s0 = inlined_call_operand.hbm [shape: f32[16,32], index: 0, kind: input, shape index: {}]
  %s1 = inlined_call_operand.hbm [shape: f32[32,64], index: 1, kind: input, shape index: {}]
  %s2 = inlined_call_operand.vmem [shape: f32[1,64], index: 2, kind: input, shape index: {}]
  %s3 = inlined_call_operand.hbm [shape: f32[16,64], index: 3, kind: output, shape index: {}]
  %s4 = sld [smem:[#allocation0]]
  $region30: #{generator_forward.1} parent=0
    _
  %s6 = ssub.s32 1, %s4
  %s7 = scalar_select 0, %s6, %s4
  $region1: #{generator_forward.1} parent=0
    #allocation2 [shape = 'u8[8192]{0}', space=vmem, size = 0x2000, scoped, tag = 'input window, operand 0, single buffered']
    #allocation3 [shape = 's32[1]{0}', space=sflag, size = 0x4, scoped, tag = 'scoped memory for generator_forward.1']
    #allocation4 [shape = 's32[1]{0}', space=sflag, size = 0x4, scoped, tag = 'scoped memory for generator_forward.1']
    #allocation5 [shape = 'u8[16384]{0}', space=vmem, size = 0x4000, scoped, tag = 'input window, operand 1, single buffered']
    #allocation6 [shape = 's32[1]{0}', space=sflag, size = 0x4, scoped, tag = 'scoped memory for generator_forward.1']
    #allocation7 [shape = 'u8[8192]{0}', space=vmem, size = 0x2000, scoped, tag = 'output window, operand 0, single buffered']
    %8 = vsyncpa [#allocation3], 0
    %9 = vsyncpa [#allocation6], 0
    %10 = vsyncpa [#allocation4], 0
    // Predicated region
    $region2: #{generator_forward.1} parent=1 // pred_check
      _
    $region3: #{generator_forward.1} parent=1 // pred_check_branch
      %12 = sbr.rel (0) target = $region5
    $region4: #{generator_forward.1} parent=1 // pred_region
      %14 = vsyncadd [#allocation3], 0
      %s15 = sshll.u32 %s0, 4
      %s16 = int_to_ptr.hbm [resolvable:$true] %s15
      %s17 = sshll.u32 [#allocation2], 4
      %s18 = int_to_ptr.vmem [resolvable:$true] %s17
      %23 = dma.hbm_to_vmem [thread:$0]  %s16, 256, %s18, [#allocation3], 128, 128, 8
    $region5: #{generator_forward.1} parent=1 // pred_fallthru
      _
    // Predicated region
    $region6: #{generator_forward.1} parent=1 // pred_check
      _
    $region7: #{generator_forward.1} parent=1 // pred_check_branch
      %25 = sbr.rel (0) target = $region9
    $region8: #{generator_forward.1} parent=1 // pred_region
      %27 = vsyncadd [#allocation6], 0
      %s28 = sshll.u32 %s1, 4
      %s29 = int_to_ptr.hbm [resolvable:$true] %s28
      %s30 = sshll.u32 [#allocation5], 4
      %s31 = int_to_ptr.vmem [resolvable:$true] %s30
      %36 = dma.hbm_to_vmem [thread:$0]  %s29, 512, %s31, [#allocation6], 128, 128, 8
    $region9: #{generator_forward.1} parent=1 // pred_fallthru
      _
    // Predicated region
    $region10: #{generator_forward.1} parent=1 // pred_check
      _
    $region11: #{generator_forward.1} parent=1 // pred_check_branch
      %38 = sbr.rel (0) target = $region13
    $region12: #{generator_forward.1} parent=1 // pred_region
      _
    $region13: #{generator_forward.1} parent=1 // pred_fallthru
      _
    // Predicated region
    $region14: #{generator_forward.1} parent=1 // pred_check
      _
    $region15: #{generator_forward.1} parent=1 // pred_check_branch
      %40 = sbr.rel (0) target = $region17
    $region16: #{generator_forward.1} parent=1 // pred_region
      %42 = dma.done [#allocation3], 256
    $region17: #{generator_forward.1} parent=1 // pred_fallthru
      _
    // Predicated region
    $region18: #{generator_forward.1} parent=1 // pred_check
      _
    $region19: #{generator_forward.1} parent=1 // pred_check_branch
      %44 = sbr.rel (0) target = $region21
    $region20: #{generator_forward.1} parent=1 // pred_region
      %46 = dma.done [#allocation6], 512
    $region21: #{generator_forward.1} parent=1 // pred_fallthru
      _
    %v47 = vld [vmem:[#allocation2] sm:$0xff]
    %v48 = vld [vmem:[#allocation2 + $0x8] sm:$0xff]
    %v49 = vld [vmem:[#allocation5] sm:$0xff]
    %v50 = vld [vmem:[#allocation5 + $0x8] sm:$0xff]
    %v51 = vld [vmem:[#allocation5 + $0x10] sm:$0xff]
    %v52 = vld [vmem:[#allocation5 + $0x18] sm:$0xff]
    %v53 = vld [vmem:[%s2] sm:$0x1]
    %v55 = vperm.slane %v53, 0
    %vm57 = vcmask 261120
    %v59 = vsel %vm57, %v47, 0
    %v62 = vsel %vm57, %v48, 0
    %64 = vmatpush.msra.mxu0 0.0
    %65 = vmatpush.msra.mxu0 0.0
    %66 = vmatpush.msra.mxu0 0.0
    %67 = vmatpush.msra.mxu0 0.0
    %68 = vmatpush.msra.mxu0 0.0
    %69 = vmatpush.msra.mxu0 0.0
    %70 = vmatpush.msra.mxu0 0.0
    %71 = vmatpush.msra.mxu0 0.0
    %72 = vmatpush.msra.mxu0 0.0
    %73 = vmatpush.msra.mxu0 0.0
    %74 = vmatpush.msra.mxu0 0.0
    %75 = vmatpush.msra.mxu0 0.0
    %76 = vmatpush.msra.mxu0 %v52
    %77 = vmatpush.msra.mxu0 %v51
    %78 = vmatpush.msra.mxu0 %v50
    %79 = vmatpush.msra.mxu0 %v49
    %80 = vmatmul.f32.gmra.mxu0 %v59
    %v81 = vpop.f32.mrf.mxu0
    %v82 = vadd.f32 %v55, %v81
    %83 = vmatmul.f32.gmra.mxu0 %v62
    %v84 = vpop.f32.mrf.mxu0
    %v85 = vadd.f32 %v55, %v84
    %86 = vdwg.mxu0
    %vm87 = vcmask 523264
    %88 = vst.msk [vmem:[#allocation7] sm:$0xff] %vm87, %v82
    %89 = vst.msk [vmem:[#allocation7 + $0x8] sm:$0xff] %vm87, %v85
    // Predicated region
    $region22: #{generator_forward.1} parent=1 // pred_check
      _
    $region23: #{generator_forward.1} parent=1 // pred_check_branch
      %91 = sbr.rel (0) target = $region25
    $region24: #{generator_forward.1} parent=1 // pred_region
      %93 = vsyncadd [#allocation4], 0
      %s94 = sshll.u32 [#allocation7], 4
      %s95 = int_to_ptr.vmem [resolvable:$true] %s94
      %s96 = sshll.u32 %s3, 4
      %s97 = int_to_ptr.hbm [resolvable:$true] %s96
      %102 = dma.vmem_to_hbm [thread:$0]  %s95, 256, %s97, [#allocation4], 128, 128, 8
    $region25: #{generator_forward.1} parent=1 // pred_fallthru
      _
    // Predicated region
    $region26: #{generator_forward.1} parent=1 // pred_check
      _
    $region27: #{generator_forward.1} parent=1 // pred_check_branch
      %104 = sbr.rel (0) target = $region29
    $region28: #{generator_forward.1} parent=1 // pred_region
      %106 = dma.done [#allocation4], 256
    $region29: #{generator_forward.1} parent=1 // pred_fallthru
      _
    %107 = vsyncpa [#allocation3], 1
    %108 = vsyncpa [#allocation6], 1
    %109 = vsyncpa [#allocation4], 1

</llo_original>
